<compile_context>
chip_gen: v5e
topology: v5e:2x2
jax: 0.10.0
libtpu: 0.0.40
codegen_flags: <defaults>
</compile_context>

<pallas_src>
import functools

import numpy as np
import jax
import jax.numpy as jnp
from jax import lax
from jax.experimental import pallas as pl
from jax.experimental.pallas import tpu as pltpu

LANE = 128
SUBLANE = 8


def _round_up(x, m):
    return (x + m - 1) // m * m


# ----------------------------------------------------------------------------
# Kernel: whole encoder as a chain of (B,Fin)@(Fin,Fout)+bias [+ReLU] matmuls.
# Activations never leave VMEM; weights are VMEM-resident across grid steps.
# ----------------------------------------------------------------------------
def make_encoder_kernel(num_layers):
    def kernel(*refs):
        x_ref = refs[0]
        o_ref = refs[-1]
        wb = refs[1:-1]                        # (w0, b0, w1, b1, ...)
        h = x_ref[...]
        for i in range(num_layers):
            w = wb[2 * i][...]                 # (Fin, Fout) lane-padded
            b = wb[2 * i + 1][...]             # (1, Fout)
            h = jnp.dot(h, w, preferred_element_type=jnp.float32) + b
            if i < num_layers - 1:             # ReLU on every block, not on
                h = jnp.maximum(h, 0.0)        # the final encoder_linear
        o_ref[...] = h.astype(o_ref.dtype)
    return kernel


# ----------------------------------------------------------------------------
# Host-side (numpy) weight fusion:  Conv1d(k=3, pad=1)  ∘  Linear(Lin -> Lout)
#   z[c_out, m] = sum_{c_in, l_in} W[(c_out,m),(c_in,l_in)] * x[c_in, l_in]
#                 + bc[c_out] * sum_l wl[m, l] + bl[m]
# ----------------------------------------------------------------------------
def fuse_block(wc, bc, wl, bl):
    wc = np.asarray(wc); bc = np.asarray(bc)
    wl = np.asarray(wl); bl = np.asarray(bl)
    Cout, Cin, _ = wc.shape
    Lout, Lin = wl.shape
    # T_k[m, l_in] = wl[m, l_in + 1 - k]  (zero outside bounds; padding=1)
    taps = np.stack(
        [np.pad(wl[:, 1:], ((0, 0), (0, 1))),    # k = 0 (tap touches x[l-1])
         wl,                                     # k = 1
         np.pad(wl[:, :-1], ((0, 0), (1, 0)))],  # k = 2 (tap touches x[l+1])
        axis=0)                                  # (3, Lout, Lin)
    M = np.einsum('ock,kml->omcl', wc, taps)     # (Cout, Lout, Cin, Lin)
    W = M.reshape(Cout * Lout, Cin * Lin)        # out c*Lout+m, in c*Lin+l
    b = (bc[:, None] * wl.sum(axis=1)[None, :] + bl[None, :]).reshape(-1)
    return W, b


def build_fused_params(blocks, wf, bf):
    """Fuse + lane-pad all encoder weights ONCE. Returns list of (W, b) jnp arrays,
    W: (Fin_pad, Fout_pad) f32, b: (1, Fout_pad) f32."""
    mats = []
    for i, (wc, bc, wl, bl) in enumerate(blocks):
        W, b = fuse_block(wc, bc, wl, bl)
        if i == 0:
            # Fold x.permute(0,2,1)+flatten into the first weight: re-index
            # input columns from channel-major (c*L0+l) to row-major (l*C0+c).
            Cin, Lin = wc.shape[1], wl.shape[1]
            W = W.reshape(-1, Cin, Lin).transpose(0, 2, 1).reshape(-1, Lin * Cin)
        mats.append((W.T, b))                    # (Fin, Fout), (Fout,)
    # Final encoder_linear: flatten order of last block output (c*L_last+m)
    # matches torch.flatten(x, 1, 2), so wf applies directly.
    mats.append((np.asarray(wf).T, np.asarray(bf)))

    padded = []
    prev_out_pad = mats[0][0].shape[0]           # first Fin = L0*C0 (natural)
    for (W, b) in mats:
        fin, fout = W.shape
        fin_pad = prev_out_pad                   # matches previous padded Fout
        fout_pad = _round_up(fout, LANE)         # lane-dense outputs
        Wp = np.zeros((fin_pad, fout_pad), np.float32)
        Wp[:fin, :fout] = W
        bp = np.zeros((1, fout_pad), np.float32)
        bp[0, :fout] = b
        padded.append((jnp.asarray(Wp), jnp.asarray(bp)))
        prev_out_pad = fout_pad
    return padded


# ----------------------------------------------------------------------------
# Forward builder: mats are closed-over constants of the jitted forward.
# ----------------------------------------------------------------------------
def make_encoder_fn(mats, latent):
    num_layers = len(mats)
    kernel = make_encoder_kernel(num_layers)
    fout_pad = int(mats[-1][0].shape[1])

    @jax.jit
    def forward(x):
        B, L0, C0 = x.shape
        x_flat = x.reshape(B, L0 * C0)           # contiguous — free view
        fin = x_flat.shape[1]

        b_tile = 256 if B >= 256 else _round_up(B, SUBLANE)
        Bp = _round_up(B, b_tile)
        if Bp != B:
            x_flat = jnp.pad(x_flat, ((0, Bp - B), (0, 0)))

        in_specs = [pl.BlockSpec((b_tile, fin), lambda b: (b, 0))]
        args = [x_flat]
        for (W, bias) in mats:
            in_specs.append(pl.BlockSpec(W.shape, lambda b: (0, 0)))      # resident
            in_specs.append(pl.BlockSpec(bias.shape, lambda b: (0, 0)))   # resident
            args.append(W)
            args.append(bias)

        out = pl.pallas_call(
            kernel,
            out_shape=jax.ShapeDtypeStruct((Bp, fout_pad), jnp.float32),
            grid=(Bp // b_tile,),
            in_specs=in_specs,
            out_specs=pl.BlockSpec((b_tile, fout_pad), lambda b: (b, 0)),
            compiler_params=pltpu.CompilerParams(
                dimension_semantics=("parallel",)),
        )(*args)
        return out[:B, :latent]

    return forward


# ----------------------------------------------------------------------------
# Pure-JAX reference (mirrors the PyTorch forward, unfused) for verification
# ----------------------------------------------------------------------------
def reference_forward(x, blocks, wf, bf):
    h = jnp.transpose(x, (0, 2, 1))              # (B, C, L)
    for (wc, bc, wl, bl) in blocks:
        h = lax.conv_general_dilated(
            h, wc, window_strides=(1,), padding=((1, 1),),
            dimension_numbers=('NCH', 'OIH', 'NCH')) + bc[None, :, None]
        h = jnp.einsum('bcl,ml->bcm', h, wl) + bl[None, None, :]
        h = jnp.maximum(h, 0.0)
    h = h.reshape(h.shape[0], -1)
    return jnp.einsum('bf,of->bo', h, wf) + bf[None, :]


# ----------------------------------------------------------------------------
# Main
# ----------------------------------------------------------------------------
if __name__ == "__main__":
    encoder_features = [4, 8, 16]
    sizes_downsample = [16, 8, 4]
    latent_space = 32
    batch = 2

    key = jax.random.PRNGKey(0)

    # Deterministic parameter init (shapes follow the PyTorch module __init__).
    blocks = []
    for i in range(len(encoder_features) - 1):
        key, k1, k2, k3, k4 = jax.random.split(key, 5)
        cin, cout = encoder_features[i], encoder_features[i + 1]
        lin_in, lin_out = sizes_downsample[i], sizes_downsample[i + 1]
        wc = 0.1 * jax.random.normal(k1, (cout, cin, 3), jnp.float32)
        bc = 0.1 * jax.random.normal(k2, (cout,), jnp.float32)
        wl = 0.1 * jax.random.normal(k3, (lin_out, lin_in), jnp.float32)
        bl = 0.1 * jax.random.normal(k4, (lin_out,), jnp.float32)
        blocks.append((wc, bc, wl, bl))

    key, k5, k6, kx = jax.random.split(key, 4)
    final_in = encoder_features[-1] * sizes_downsample[-1]
    wf = 0.1 * jax.random.normal(k5, (latent_space, final_in), jnp.float32)
    bf = 0.1 * jax.random.normal(k6, (latent_space,), jnp.float32)

    # Input: (B, L0, C0) = (batch, sizes_downsample[0], encoder_features[0])
    x = jax.random.normal(kx, (batch, sizes_downsample[0], encoder_features[0]),
                          jnp.float32)

    # Fuse weights once (host-side), build the jitted forward.
    mats = build_fused_params(blocks, wf, bf)
    encoder = make_encoder_fn(mats, latent_space)

    out = encoder(x)
    out = jax.block_until_ready(out)

    ref = reference_forward(x, blocks, wf, bf)
    assert out.shape == (batch, latent_space), out.shape
    assert jnp.allclose(out, ref, rtol=1e-4, atol=1e-4), (
        float(jnp.max(jnp.abs(out - ref))))

    print("KERNEL_OK")
</pallas_src>

<mosaic_0001>
module attributes {stable_mosaic.version = 11 : i64} {
  func.func @kernel(%arg0: i32, %arg1: memref<8x64xf32, #tpu.memory_space<vmem>>, %arg2: memref<64x128xf32, #tpu.memory_space<vmem>>, %arg3: memref<1x128xf32, #tpu.memory_space<vmem>>, %arg4: memref<128x128xf32, #tpu.memory_space<vmem>>, %arg5: memref<1x128xf32, #tpu.memory_space<vmem>>, %arg6: memref<128x128xf32, #tpu.memory_space<vmem>>, %arg7: memref<1x128xf32, #tpu.memory_space<vmem>>, %arg8: memref<8x128xf32, #tpu.memory_space<vmem>>) attributes {dimension_semantics = [#tpu.dimension_semantics<parallel>], iteration_bounds = array<i64: 1>, scalar_prefetch = 0 : i64, scratch_operands = 0 : i64, tpu.core_type = #tpu.core_type<tc>, window_params = [{transform_indices = @transform_0, window_bounds = array<i64: 8, 64>}, {pipeline_mode = #tpu.pipeline_mode<synchronous>, transform_indices = @transform_1, window_bounds = array<i64: 64, 128>}, {pipeline_mode = #tpu.pipeline_mode<synchronous>, transform_indices = @transform_2, window_bounds = array<i64: 1, 128>}, {pipeline_mode = #tpu.pipeline_mode<synchronous>, transform_indices = @transform_3, window_bounds = array<i64: 128, 128>}, {pipeline_mode = #tpu.pipeline_mode<synchronous>, transform_indices = @transform_4, window_bounds = array<i64: 1, 128>}, {pipeline_mode = #tpu.pipeline_mode<synchronous>, transform_indices = @transform_5, window_bounds = array<i64: 128, 128>}, {pipeline_mode = #tpu.pipeline_mode<synchronous>, transform_indices = @transform_6, window_bounds = array<i64: 1, 128>}, {transform_indices = @transform_7, window_bounds = array<i64: 8, 128>}]} {
    %c0 = arith.constant 0 : index
    %c0_0 = arith.constant 0 : index
    %0 = vector.load %arg1[%c0, %c0_0] : memref<8x64xf32, #tpu.memory_space<vmem>>, vector<8x64xf32>
    %c0_1 = arith.constant 0 : index
    %c0_2 = arith.constant 0 : index
    %1 = vector.load %arg2[%c0_1, %c0_2] : memref<64x128xf32, #tpu.memory_space<vmem>>, vector<64x128xf32>
    %c0_3 = arith.constant 0 : index
    %c0_4 = arith.constant 0 : index
    %2 = vector.load %arg3[%c0_3, %c0_4] : memref<1x128xf32, #tpu.memory_space<vmem>>, vector<1x128xf32>
    %cst = arith.constant dense<0.000000e+00> : vector<8x128xf32>
    %3 = tpu.matmul %0, %1, %cst {dimension_numbers = #tpu.dot_dimension_numbers<[1], [0], [0], [1], [0, 0, 1, 1], [], []>} : vector<8x64xf32>, vector<64x128xf32>, vector<8x128xf32> -> vector<8x128xf32>
    %4 = vector.broadcast %2 : vector<1x128xf32> to vector<8x128xf32>
    %5 = arith.addf %3, %4 : vector<8x128xf32>
    %cst_5 = arith.constant 0.000000e+00 : f32
    %6 = vector.broadcast %cst_5 : f32 to vector<8x128xf32>
    %7 = arith.maximumf %5, %6 : vector<8x128xf32>
    %c0_6 = arith.constant 0 : index
    %c0_7 = arith.constant 0 : index
    %8 = vector.load %arg4[%c0_6, %c0_7] : memref<128x128xf32, #tpu.memory_space<vmem>>, vector<128x128xf32>
    %c0_8 = arith.constant 0 : index
    %c0_9 = arith.constant 0 : index
    %9 = vector.load %arg5[%c0_8, %c0_9] : memref<1x128xf32, #tpu.memory_space<vmem>>, vector<1x128xf32>
    %cst_10 = arith.constant dense<0.000000e+00> : vector<8x128xf32>
    %10 = tpu.matmul %7, %8, %cst_10 {dimension_numbers = #tpu.dot_dimension_numbers<[1], [0], [0], [1], [0, 0, 1, 1], [], []>} : vector<8x128xf32>, vector<128x128xf32>, vector<8x128xf32> -> vector<8x128xf32>
    %11 = vector.broadcast %9 : vector<1x128xf32> to vector<8x128xf32>
    %12 = arith.addf %10, %11 : vector<8x128xf32>
    %cst_11 = arith.constant 0.000000e+00 : f32
    %13 = vector.broadcast %cst_11 : f32 to vector<8x128xf32>
    %14 = arith.maximumf %12, %13 : vector<8x128xf32>
    %c0_12 = arith.constant 0 : index
    %c0_13 = arith.constant 0 : index
    %15 = vector.load %arg6[%c0_12, %c0_13] : memref<128x128xf32, #tpu.memory_space<vmem>>, vector<128x128xf32>
    %c0_14 = arith.constant 0 : index
    %c0_15 = arith.constant 0 : index
    %16 = vector.load %arg7[%c0_14, %c0_15] : memref<1x128xf32, #tpu.memory_space<vmem>>, vector<1x128xf32>
    %cst_16 = arith.constant dense<0.000000e+00> : vector<8x128xf32>
    %17 = tpu.matmul %14, %15, %cst_16 {dimension_numbers = #tpu.dot_dimension_numbers<[1], [0], [0], [1], [0, 0, 1, 1], [], []>} : vector<8x128xf32>, vector<128x128xf32>, vector<8x128xf32> -> vector<8x128xf32>
    %18 = vector.broadcast %16 : vector<1x128xf32> to vector<8x128xf32>
    %19 = arith.addf %17, %18 : vector<8x128xf32>
    %c0_17 = arith.constant 0 : index
    %c0_18 = arith.constant 0 : index
    %20 = vector.load %arg8[%c0_17, %c0_18] : memref<8x128xf32, #tpu.memory_space<vmem>>, vector<8x128xf32>
    tpu.vector_store %arg8[%c0_17, %c0_18], %19 {strides = array<i32>} : memref<8x128xf32, #tpu.memory_space<vmem>>, vector<8x128xf32>,
    return
  }
  func.func @transform_0(%arg0: i32) -> (i32, i32) {
    %c0_i32 = arith.constant 0 : i32
    %c0_i32_0 = arith.constant 0 : i32
    return %arg0, %c0_i32 : i32, i32
  }
  func.func @transform_1(%arg0: i32) -> (i32, i32) {
    %c0_i32 = arith.constant 0 : i32
    %c0_i32_0 = arith.constant 0 : i32
    %c0_i32_1 = arith.constant 0 : i32
    return %c0_i32, %c0_i32_0 : i32, i32
  }
  func.func @transform_2(%arg0: i32) -> (i32, i32) {
    %c0_i32 = arith.constant 0 : i32
    %c0_i32_0 = arith.constant 0 : i32
    %c0_i32_1 = arith.constant 0 : i32
    return %c0_i32, %c0_i32_0 : i32, i32
  }
  func.func @transform_3(%arg0: i32) -> (i32, i32) {
    %c0_i32 = arith.constant 0 : i32
    %c0_i32_0 = arith.constant 0 : i32
    %c0_i32_1 = arith.constant 0 : i32
    return %c0_i32, %c0_i32_0 : i32, i32
  }
  func.func @transform_4(%arg0: i32) -> (i32, i32) {
    %c0_i32 = arith.constant 0 : i32
    %c0_i32_0 = arith.constant 0 : i32
    %c0_i32_1 = arith.constant 0 : i32
    return %c0_i32, %c0_i32_0 : i32, i32
  }
  func.func @transform_5(%arg0: i32) -> (i32, i32) {
    %c0_i32 = arith.constant 0 : i32
    %c0_i32_0 = arith.constant 0 : i32
    %c0_i32_1 = arith.constant 0 : i32
    return %c0_i32, %c0_i32_0 : i32, i32
  }
  func.func @transform_6(%arg0: i32) -> (i32, i32) {
    %c0_i32 = arith.constant 0 : i32
    %c0_i32_0 = arith.constant 0 : i32
    %c0_i32_1 = arith.constant 0 : i32
    return %c0_i32, %c0_i32_0 : i32, i32
  }
  func.func @transform_7(%arg0: i32) -> (i32, i32) {
    %c0_i32 = arith.constant 0 : i32
    %c0_i32_0 = arith.constant 0 : i32
    return %arg0, %c0_i32 : i32, i32
  }
}

</mosaic_0001>

<llo_original>
// kernel: forward.1
$region0: #{forward.1}
  #allocation0 [shape = 'u32[]', space=smem, size = 0x4, offset = 0x4, fixed_abs, tag = 'smem constant byte address 0x4 - core index']
  #allocation1 [shape = 'u32[72,128]{1,0:T(1,128)}', space=vmem, size = 0x9000, scoped, tag = 'internal scratch']
  %s0 = inlined_call_operand.vmem [shape: f32[8,64], index: 0, kind: input, shape index: {}]
  %s1 = inlined_call_operand.vmem [shape: f32[64,128], index: 1, kind: input, shape index: {}]
  %s2 = inlined_call_operand.vmem [shape: f32[1,128], index: 2, kind: input, shape index: {}]
  %s3 = inlined_call_operand.hbm [shape: f32[128,128], index: 3, kind: input, shape index: {}]
  %s4 = inlined_call_operand.vmem [shape: f32[1,128], index: 4, kind: input, shape index: {}]
  %s5 = inlined_call_operand.hbm [shape: f32[128,128], index: 5, kind: input, shape index: {}]
  %s6 = inlined_call_operand.vmem [shape: f32[1,128], index: 6, kind: input, shape index: {}]
  %s7 = inlined_call_operand.vmem [shape: f32[8,128], index: 7, kind: output, shape index: {}]
  %s8 = sld [smem:[#allocation0]]
  $region46: #{forward.1} parent=0
    _
  %s10 = ssub.s32 1, %s8
  %s11 = scalar_select 0, %s10, %s8
  $region1: #{forward.1} parent=0
    #allocation2 [shape = 'u8[65536]{0}', space=vmem, size = 0x10000, scoped, tag = 'input window, operand 3, single buffered']
    #allocation3 [shape = 's32[1]{0}', space=sflag, size = 0x4, scoped, tag = 'scoped memory for forward.1']
    #allocation4 [shape = 'u8[65536]{0}', space=vmem, size = 0x10000, scoped, tag = 'input window, operand 5, single buffered']
    #allocation5 [shape = 's32[1]{0}', space=sflag, size = 0x4, scoped, tag = 'scoped memory for forward.1']
    %12 = vsyncpa [#allocation3], 0
    %13 = vsyncpa [#allocation5], 0
    // Predicated region
    $region2: #{forward.1} parent=1 // pred_check
      _
    $region3: #{forward.1} parent=1 // pred_check_branch
      %15 = sbr.rel (0) target = $region5
    $region4: #{forward.1} parent=1 // pred_region
      _
    $region5: #{forward.1} parent=1 // pred_fallthru
      _
    // Predicated region
    $region6: #{forward.1} parent=1 // pred_check
      _
    $region7: #{forward.1} parent=1 // pred_check_branch
      %17 = sbr.rel (0) target = $region9
    $region8: #{forward.1} parent=1 // pred_region
      _
    $region9: #{forward.1} parent=1 // pred_fallthru
      _
    // Predicated region
    $region10: #{forward.1} parent=1 // pred_check
      _
    $region11: #{forward.1} parent=1 // pred_check_branch
      %19 = sbr.rel (0) target = $region13
    $region12: #{forward.1} parent=1 // pred_region
      _
    $region13: #{forward.1} parent=1 // pred_fallthru
      _
    // Predicated region
    $region14: #{forward.1} parent=1 // pred_check
      _
    $region15: #{forward.1} parent=1 // pred_check_branch
      %21 = sbr.rel (0) target = $region17
    $region16: #{forward.1} parent=1 // pred_region
      %23 = vsyncadd [#allocation3], 0
      %s24 = sshll.u32 %s3, 4
      %s25 = int_to_ptr.hbm [resolvable:$true] %s24
      %s26 = sshll.u32 [#allocation2], 4
      %s27 = int_to_ptr.vmem [resolvable:$true] %s26
      %32 = dma.hbm_to_vmem [thread:$0]  %s25, 2048, %s27, [#allocation3], 128, 128, 8
    $region17: #{forward.1} parent=1 // pred_fallthru
      _
    // Predicated region
    $region18: #{forward.1} parent=1 // pred_check
      _
    $region19: #{forward.1} parent=1 // pred_check_branch
      %34 = sbr.rel (0) target = $region21
    $region20: #{forward.1} parent=1 // pred_region
      _
    $region21: #{forward.1} parent=1 // pred_fallthru
      _
    // Predicated region
    $region22: #{forward.1} parent=1 // pred_check
      _
    $region23: #{forward.1} parent=1 // pred_check_branch
      %36 = sbr.rel (0) target = $region25
    $region24: #{forward.1} parent=1 // pred_region
      %38 = vsyncadd [#allocation5], 0
      %s39 = sshll.u32 %s5, 4
      %s40 = int_to_ptr.hbm [resolvable:$true] %s39
      %s41 = sshll.u32 [#allocation4], 4
      %s42 = int_to_ptr.vmem [resolvable:$true] %s41
      %47 = dma.hbm_to_vmem [thread:$0]  %s40, 2048, %s42, [#allocation5], 128, 128, 8
    $region25: #{forward.1} parent=1 // pred_fallthru
      _
    // Predicated region
    $region26: #{forward.1} parent=1 // pred_check
      _
    $region27: #{forward.1} parent=1 // pred_check_branch
      %49 = sbr.rel (0) target = $region29
    $region28: #{forward.1} parent=1 // pred_region
      _
    $region29: #{forward.1} parent=1 // pred_fallthru
      _
    // Predicated region
    $region30: #{forward.1} parent=1 // pred_check
      _
    $region31: #{forward.1} parent=1 // pred_check_branch
      %51 = sbr.rel (0) target = $region33
    $region32: #{forward.1} parent=1 // pred_region
      %53 = dma.done [#allocation3], 2048
    $region33: #{forward.1} parent=1 // pred_fallthru
      _
    // Predicated region
    $region34: #{forward.1} parent=1 // pred_check
      _
    $region35: #{forward.1} parent=1 // pred_check_branch
      %55 = sbr.rel (0) target = $region37
    $region36: #{forward.1} parent=1 // pred_region
      %57 = dma.done [#allocation5], 2048
    $region37: #{forward.1} parent=1 // pred_fallthru
      _
    %v58 = vld [vmem:[%s0] sm:$0xff]
    %v59 = vld [vmem:[%s1] sm:$0xff]
    %v60 = vld [vmem:[%s1 + $0x8] sm:$0xff]
    %v61 = vld [vmem:[%s1 + $0x10] sm:$0xff]
    %v62 = vld [vmem:[%s1 + $0x18] sm:$0xff]
    %v63 = vld [vmem:[%s1 + $0x20] sm:$0xff]
    %v64 = vld [vmem:[%s1 + $0x28] sm:$0xff]
    %v65 = vld [vmem:[%s1 + $0x30] sm:$0xff]
    %v66 = vld [vmem:[%s1 + $0x38] sm:$0xff]
    %v67 = vld [vmem:[%s2] sm:$0x1]
    %v69 = vperm.slane %v67, 0
    %vm71 = vcmask 523264
    %v73 = vsel %vm71, %v58, 0
    %75 = vmatpush.msra.mxu0 0.0
    %76 = vmatpush.msra.mxu0 0.0
    %77 = vmatpush.msra.mxu0 0.0
    %78 = vmatpush.msra.mxu0 0.0
    %79 = vmatpush.msra.mxu0 0.0
    %80 = vmatpush.msra.mxu0 0.0
    %81 = vmatpush.msra.mxu0 0.0
    %82 = vmatpush.msra.mxu0 0.0
    %83 = vmatpush.msra.mxu0 %v66
    %84 = vmatpush.msra.mxu0 %v65
    %85 = vmatpush.msra.mxu0 %v64
    %86 = vmatpush.msra.mxu0 %v63
    %87 = vmatpush.msra.mxu0 %v62
    %88 = vmatpush.msra.mxu0 %v61
    %89 = vmatpush.msra.mxu0 %v60
    %90 = vmatpush.msra.mxu0 %v59
    %91 = vmatmul.f32.gmra.mxu0 %v73
    %v92 = vpop.f32.mrf.mxu0
    %v93 = vadd.f32 %v69, %v92
    %94 = vdwg.mxu0
    %v95 = vmax.f32 %v93, 0.0
    %v96 = vld [vmem:[#allocation2] sm:$0xff]
    %v97 = vld [vmem:[#allocation2 + $0x8] sm:$0xff]
    %v98 = vld [vmem:[#allocation2 + $0x10] sm:$0xff]
    %v99 = vld [vmem:[#allocation2 + $0x18] sm:$0xff]
    %v100 = vld [vmem:[#allocation2 + $0x20] sm:$0xff]
    %v101 = vld [vmem:[#allocation2 + $0x28] sm:$0xff]
    %v102 = vld [vmem:[#allocation2 + $0x30] sm:$0xff]
    %v103 = vld [vmem:[#allocation2 + $0x38] sm:$0xff]
    %v104 = vld [vmem:[#allocation2 + $0x40] sm:$0xff]
    %v105 = vld [vmem:[#allocation2 + $0x48] sm:$0xff]
    %v106 = vld [vmem:[#allocation2 + $0x50] sm:$0xff]
    %v107 = vld [vmem:[#allocation2 + $0x58] sm:$0xff]
    %v108 = vld [vmem:[#allocation2 + $0x60] sm:$0xff]
    %v109 = vld [vmem:[#allocation2 + $0x68] sm:$0xff]
    %v110 = vld [vmem:[#allocation2 + $0x70] sm:$0xff]
    %v111 = vld [vmem:[#allocation2 + $0x78] sm:$0xff]
    %v112 = vld [vmem:[%s4] sm:$0x1]
    %v114 = vperm.slane %v112, 0
    %116 = vmatpush.msra.mxu0 %v111
    %117 = vmatpush.msra.mxu0 %v110
    %118 = vmatpush.msra.mxu0 %v109
    %119 = vmatpush.msra.mxu0 %v108
    %120 = vmatpush.msra.mxu0 %v107
    %121 = vmatpush.msra.mxu0 %v106
    %122 = vmatpush.msra.mxu0 %v105
    %123 = vmatpush.msra.mxu0 %v104
    %124 = vmatpush.msra.mxu0 %v103
    %125 = vmatpush.msra.mxu0 %v102
    %126 = vmatpush.msra.mxu0 %v101
    %127 = vmatpush.msra.mxu0 %v100
    %128 = vmatpush.msra.mxu0 %v99
    %129 = vmatpush.msra.mxu0 %v98
    %130 = vmatpush.msra.mxu0 %v97
    %131 = vmatpush.msra.mxu0 %v96
    %132 = vmatmul.f32.gmra.mxu0 %v95
    %v133 = vpop.f32.mrf.mxu0
    %v134 = vadd.f32 %v114, %v133
    %135 = vdwg.mxu0
    %v136 = vmax.f32 %v134, 0.0
    %v137 = vld [vmem:[#allocation4] sm:$0xff]
    %v138 = vld [vmem:[#allocation4 + $0x8] sm:$0xff]
    %v139 = vld [vmem:[#allocation4 + $0x10] sm:$0xff]
    %v140 = vld [vmem:[#allocation4 + $0x18] sm:$0xff]
    %v141 = vld [vmem:[#allocation4 + $0x20] sm:$0xff]
    %v142 = vld [vmem:[#allocation4 + $0x28] sm:$0xff]
    %v143 = vld [vmem:[#allocation4 + $0x30] sm:$0xff]
    %v144 = vld [vmem:[#allocation4 + $0x38] sm:$0xff]
    %v145 = vld [vmem:[#allocation4 + $0x40] sm:$0xff]
    %v146 = vld [vmem:[#allocation4 + $0x48] sm:$0xff]
    %v147 = vld [vmem:[#allocation4 + $0x50] sm:$0xff]
    %v148 = vld [vmem:[#allocation4 + $0x58] sm:$0xff]
    %v149 = vld [vmem:[#allocation4 + $0x60] sm:$0xff]
    %v150 = vld [vmem:[#allocation4 + $0x68] sm:$0xff]
    %v151 = vld [vmem:[#allocation4 + $0x70] sm:$0xff]
    %v152 = vld [vmem:[#allocation4 + $0x78] sm:$0xff]
    %v153 = vld [vmem:[%s6] sm:$0x1]
    %v155 = vperm.slane %v153, 0
    %157 = vmatpush.msra.mxu0 %v152
    %158 = vmatpush.msra.mxu0 %v151
    %159 = vmatpush.msra.mxu0 %v150
    %160 = vmatpush.msra.mxu0 %v149
    %161 = vmatpush.msra.mxu0 %v148
    %162 = vmatpush.msra.mxu0 %v147
    %163 = vmatpush.msra.mxu0 %v146
    %164 = vmatpush.msra.mxu0 %v145
    %165 = vmatpush.msra.mxu0 %v144
    %166 = vmatpush.msra.mxu0 %v143
    %167 = vmatpush.msra.mxu0 %v142
    %168 = vmatpush.msra.mxu0 %v141
    %169 = vmatpush.msra.mxu0 %v140
    %170 = vmatpush.msra.mxu0 %v139
    %171 = vmatpush.msra.mxu0 %v138
    %172 = vmatpush.msra.mxu0 %v137
    %173 = vmatmul.f32.gmra.mxu0 %v136
    %v174 = vpop.f32.mrf.mxu0
    %v175 = vadd.f32 %v155, %v174
    %176 = vdwg.mxu0
    %177 = vst [vmem:[%s7] sm:$0xff] %v175
    // Predicated region
    $region38: #{forward.1} parent=1 // pred_check
      _
    $region39: #{forward.1} parent=1 // pred_check_branch
      %179 = sbr.rel (0) target = $region41
    $region40: #{forward.1} parent=1 // pred_region
      _
    $region41: #{forward.1} parent=1 // pred_fallthru
      _
    // Predicated region
    $region42: #{forward.1} parent=1 // pred_check
      _
    $region43: #{forward.1} parent=1 // pred_check_branch
      %181 = sbr.rel (0) target = $region45
    $region44: #{forward.1} parent=1 // pred_region
      _
    $region45: #{forward.1} parent=1 // pred_fallthru
      _
    %182 = vsyncpa [#allocation3], 1
    %183 = vsyncpa [#allocation5], 1

</llo_original>
